<compile_context>
chip_gen: v7x
topology: tpu7x:2x2x1
jax: 0.10.0
libtpu: 0.0.40
codegen_flags: <defaults>
</compile_context>

<pallas_src>
import functools

import jax
import jax.numpy as jnp
from jax.experimental import pallas as pl
from jax.experimental.pallas import tpu as pltpu


def _round_up(v, m):
    return (v + m - 1) // m * m


def _classifier_kernel(x_ref, w_ref, b_ref, o_ref, *, inv_hw):
    # x_ref: (TB, HW, Cp)   w_ref: (Cp, Np)   b_ref: (1, Np)   o_ref: (TB, Np)
    # Global average pool: sublane-direction reduce with an f32 accumulator,
    # then a single cheap VPU multiply by 1/HW on the small pooled result.
    pooled = jnp.sum(x_ref[...], axis=1, dtype=jnp.float32) * inv_hw   # (TB, Cp)
    # Linear head on the MXU: operands in the parameter dtype, f32 accumulate.
    out = jnp.dot(pooled.astype(w_ref.dtype), w_ref[...],
                  preferred_element_type=jnp.float32)                  # (TB, Np)
    out = out + b_ref[...].astype(jnp.float32)
    o_ref[...] = out.astype(o_ref.dtype)


def _choose_batch_tile(b_total, hw, cp, itemsize,
                       input_budget_bytes=16 << 20, max_tile=256):
    """Largest 8-aligned batch tile whose double-buffered input fits the budget.

    16 MiB of double-buffered activation keeps the kernel comfortably inside
    v7x's 64 MiB physical VMEM while still reaching large (128-256 row) tiles
    on v6e/v5e shapes where the per-sample footprint is small.
    """
    per_sample = hw * cp * itemsize
    tb = max(8, (input_budget_bytes // (2 * per_sample)) // 8 * 8)
    tb = min(tb, max_tile, _round_up(b_total, 8))
    return int(tb)


def shufflenetv2_classifier(x, weight, bias):
    """x: (B, C, H, W) NCHW; weight: (n_classes, C) (PyTorch); bias: (n_classes,)."""
    B, C, H, W = x.shape
    n_classes = weight.shape[0]
    HW = H * W

    # Lane-dense padded sizes (real ShuffleNetV2: C=1024, already a multiple).
    Cp = _round_up(C, 128)
    Np = _round_up(n_classes, 128)

    # Layout plumbing (done once in XLA): NCHW -> (B, HW, C) so C is the lane
    # axis, then zero-pad channels / classes up to 128 multiples.
    # TODO(synk): in a full ShuffleNetV2 the upstream conv should emit this
    # NHWC-flattened layout directly so this transpose/pad disappears.
    x_l = jnp.transpose(x, (0, 2, 3, 1)).reshape(B, HW, C)
    if Cp != C:
        x_l = jnp.pad(x_l, ((0, 0), (0, 0), (0, Cp - C)))

    w_t = weight.T                                             # (C, n_classes)
    w_p = jnp.pad(w_t, ((0, Cp - C), (0, Np - n_classes)))     # zero pad -> exact
    b_p = jnp.pad(bias, (0, Np - n_classes)).reshape(1, Np)

    # Batch tiling: pad B to a multiple of the tile so every block is full.
    itemsize = jnp.dtype(x.dtype).itemsize
    TB = _choose_batch_tile(B, HW, Cp, itemsize)
    Bp = _round_up(B, TB)
    if Bp != B:
        x_l = jnp.pad(x_l, ((0, Bp - B), (0, 0), (0, 0)))

    grid = (Bp // TB,)

    cost = pl.CostEstimate(
        flops=2 * B * C * HW + 2 * B * C * n_classes,
        transcendentals=0,
        bytes_accessed=(x_l.size * itemsize
                        + w_p.size * jnp.dtype(w_p.dtype).itemsize
                        + Bp * Np * itemsize),
    )

    out = pl.pallas_call(
        functools.partial(_classifier_kernel, inv_hw=1.0 / float(HW)),
        out_shape=jax.ShapeDtypeStruct((Bp, Np), x.dtype),
        grid_spec=pltpu.PrefetchScalarGridSpec(
            num_scalar_prefetch=0,
            grid=grid,
            in_specs=[
                # Streamed, double-buffered activation tiles over the batch.
                pl.BlockSpec((TB, HW, Cp), lambda i: (i, 0, 0)),
                # Weight / bias: constant index_map -> stay resident in VMEM.
                pl.BlockSpec((Cp, Np), lambda i: (0, 0)),
                pl.BlockSpec((1, Np), lambda i: (0, 0)),
            ],
            out_specs=pl.BlockSpec((TB, Np), lambda i: (i, 0)),
        ),
        compiler_params=pltpu.CompilerParams(
            dimension_semantics=("parallel",),   # batch steps are independent
            vmem_limit_bytes=32 << 20,
        ),
        cost_estimate=cost,
    )(x_l, w_p, b_p)

    # Drop batch / class padding.
    return out[:B, :n_classes]


if __name__ == "__main__":
    # Small shapes consistent with the module: out_size = C = 4, n_classes = 8.
    B, C, H, W = 2, 4, 16, 16
    n_classes = 8

    key = jax.random.PRNGKey(0)
    kx, kw, kb = jax.random.split(key, 3)

    x = jax.random.normal(kx, (B, C, H, W), dtype=jnp.float32)
    # Deterministic parameter init (shapes match nn.Linear(out_size, n_classes)).
    weight = jax.random.normal(kw, (n_classes, C), dtype=jnp.float32) * 0.1
    bias = jax.random.normal(kb, (n_classes,), dtype=jnp.float32) * 0.1

    out = shufflenetv2_classifier(x, weight, bias)
    out = jax.block_until_ready(out)

    # Reference in plain JAX (matches the PyTorch forward).
    ref = x.mean(axis=(2, 3)) @ weight.T + bias
    assert out.shape == (B, n_classes)
    assert jnp.allclose(out, ref, atol=1e-5, rtol=1e-5), "mismatch vs reference"

    print("KERNEL_OK")
</pallas_src>

<mosaic_0001>
module attributes {stable_mosaic.version = 11 : i64} {
  func.func @_classifier_kernel(%arg0: i32, %arg1: memref<8x256x128xf32, #tpu.memory_space<vmem>>, %arg2: memref<128x128xf32, #tpu.memory_space<vmem>>, %arg3: memref<1x128xf32, #tpu.memory_space<vmem>>, %arg4: memref<8x128xf32, #tpu.memory_space<vmem>>) attributes {dimension_semantics = [#tpu.dimension_semantics<parallel>], iteration_bounds = array<i64: 1>, scalar_prefetch = 0 : i64, scratch_operands = 0 : i64, tpu.core_type = #tpu.core_type<tc>, window_params = [{transform_indices = @transform_0, window_bounds = array<i64: 8, 256, 128>}, {pipeline_mode = #tpu.pipeline_mode<synchronous>, transform_indices = @transform_1, window_bounds = array<i64: 128, 128>}, {pipeline_mode = #tpu.pipeline_mode<synchronous>, transform_indices = @transform_2, window_bounds = array<i64: 1, 128>}, {transform_indices = @transform_3, window_bounds = array<i64: 8, 128>}]} {
    %c0 = arith.constant 0 : index
    %c0_0 = arith.constant 0 : index
    %c0_1 = arith.constant 0 : index
    %0 = vector.load %arg1[%c0, %c0_0, %c0_1] : memref<8x256x128xf32, #tpu.memory_space<vmem>>, vector<8x256x128xf32>
    %cst = arith.constant dense<0.000000e+00> : vector<8x128xf32>
    %1 = vector.multi_reduction <add>, %0, %cst [1] : vector<8x256x128xf32> to vector<8x128xf32>
    %cst_2 = arith.constant 3.906250e-03 : f32
    %2 = vector.broadcast %cst_2 : f32 to vector<8x128xf32>
    %3 = arith.mulf %1, %2 : vector<8x128xf32>
    %c0_3 = arith.constant 0 : index
    %c0_4 = arith.constant 0 : index
    %4 = vector.load %arg2[%c0_3, %c0_4] : memref<128x128xf32, #tpu.memory_space<vmem>>, vector<128x128xf32>
    %cst_5 = arith.constant dense<0.000000e+00> : vector<8x128xf32>
    %5 = tpu.matmul %3, %4, %cst_5 {dimension_numbers = #tpu.dot_dimension_numbers<[1], [0], [0], [1], [0, 0, 1, 1], [], []>} : vector<8x128xf32>, vector<128x128xf32>, vector<8x128xf32> -> vector<8x128xf32>
    %c0_6 = arith.constant 0 : index
    %c0_7 = arith.constant 0 : index
    %6 = vector.load %arg3[%c0_6, %c0_7] : memref<1x128xf32, #tpu.memory_space<vmem>>, vector<1x128xf32>
    %7 = vector.broadcast %6 : vector<1x128xf32> to vector<8x128xf32>
    %8 = arith.addf %5, %7 : vector<8x128xf32>
    %c0_8 = arith.constant 0 : index
    %c0_9 = arith.constant 0 : index
    %9 = vector.load %arg4[%c0_8, %c0_9] : memref<8x128xf32, #tpu.memory_space<vmem>>, vector<8x128xf32>
    tpu.vector_store %arg4[%c0_8, %c0_9], %8 {strides = array<i32>} : memref<8x128xf32, #tpu.memory_space<vmem>>, vector<8x128xf32>,
    return
  }
  func.func @transform_0(%arg0: i32) -> (i32, i32, i32) {
    %c0_i32 = arith.constant 0 : i32
    %c0_i32_0 = arith.constant 0 : i32
    %c0_i32_1 = arith.constant 0 : i32
    return %arg0, %c0_i32, %c0_i32_0 : i32, i32, i32
  }
  func.func @transform_1(%arg0: i32) -> (i32, i32) {
    %c0_i32 = arith.constant 0 : i32
    %c0_i32_0 = arith.constant 0 : i32
    %c0_i32_1 = arith.constant 0 : i32
    return %c0_i32, %c0_i32_0 : i32, i32
  }
  func.func @transform_2(%arg0: i32) -> (i32, i32) {
    %c0_i32 = arith.constant 0 : i32
    %c0_i32_0 = arith.constant 0 : i32
    %c0_i32_1 = arith.constant 0 : i32
    return %c0_i32, %c0_i32_0 : i32, i32
  }
  func.func @transform_3(%arg0: i32) -> (i32, i32) {
    %c0_i32 = arith.constant 0 : i32
    %c0_i32_0 = arith.constant 0 : i32
    return %arg0, %c0_i32 : i32, i32
  }
}

</mosaic_0001>

<llo_original>
// kernel: tpu_custom_call.1
$region0: #{tpu_custom_call.1}
  #allocation0 [shape = 'u32[]', space=smem, size = 0x4, offset = 0x4, fixed_abs, tag = 'smem constant byte address 0x4 - core index']
  #allocation1 [shape = 'u32[144,128]{1,0:T(1,128)}', space=vmem, size = 0x12000, scoped, tag = 'internal scratch']
  %s0 = inlined_call_operand.hbm [shape: f32[8,256,128], index: 0, kind: input, shape index: {}]
  %s1 = inlined_call_operand.hbm [shape: f32[128,128], index: 1, kind: input, shape index: {}]
  %s2 = inlined_call_operand.vmem [shape: f32[1,128], index: 2, kind: input, shape index: {}]
  %s3 = inlined_call_operand.hbm [shape: f32[8,128], index: 3, kind: output, shape index: {}]
  %s4 = sld [smem:[#allocation0]]
  $region30: #{tpu_custom_call.1} parent=0
    _
  %s6 = ssub.s32 1, %s4
  %s7 = scalar_select 0, %s6, %s4
  $region1: #{tpu_custom_call.1} parent=0
    #allocation2 [shape = 'u8[1048576]{0}', space=vmem, size = 0x100000, scoped, tag = 'input window, operand 0, single buffered']
    #allocation3 [shape = 's32[1]{0}', space=sflag, size = 0x4, scoped, tag = 'scoped memory for tpu_custom_call.1']
    #allocation4 [shape = 's32[1]{0}', space=sflag, size = 0x4, scoped, tag = 'scoped memory for tpu_custom_call.1']
    #allocation5 [shape = 'u8[65536]{0}', space=vmem, size = 0x10000, scoped, tag = 'input window, operand 1, single buffered']
    #allocation6 [shape = 's32[1]{0}', space=sflag, size = 0x4, scoped, tag = 'scoped memory for tpu_custom_call.1']
    #allocation7 [shape = 'u8[4096]{0}', space=vmem, size = 0x1000, scoped, tag = 'output window, operand 0, single buffered']
    %8 = vsyncpa [#allocation3], 0
    %9 = vsyncpa [#allocation6], 0
    %10 = vsyncpa [#allocation4], 0
    // Predicated region
    $region2: #{tpu_custom_call.1} parent=1 // pred_check
      _
    $region3: #{tpu_custom_call.1} parent=1 // pred_check_branch
      %12 = sbr.rel (0) target = $region5
    $region4: #{tpu_custom_call.1} parent=1 // pred_region
      %s14 = ssub.s32 32768, 32768
      %15 = vsyncadd [#allocation3], %s14
      %s16 = sshll.u32 [#allocation2], 4
      %s17 = int_to_ptr.vmem [resolvable:$true] %s16
      %22 = dma.hbm_to_vmem [thread:$0]  %s0, 32768, %s17, [#allocation3], 128, 128, 8
    $region5: #{tpu_custom_call.1} parent=1 // pred_fallthru
      _
    // Predicated region
    $region6: #{tpu_custom_call.1} parent=1 // pred_check
      _
    $region7: #{tpu_custom_call.1} parent=1 // pred_check_branch
      %24 = sbr.rel (0) target = $region9
    $region8: #{tpu_custom_call.1} parent=1 // pred_region
      %s26 = ssub.s32 2048, 2048
      %27 = vsyncadd [#allocation6], %s26
      %s28 = sshll.u32 [#allocation5], 4
      %s29 = int_to_ptr.vmem [resolvable:$true] %s28
      %34 = dma.hbm_to_vmem [thread:$0]  %s1, 2048, %s29, [#allocation6], 128, 128, 8
    $region9: #{tpu_custom_call.1} parent=1 // pred_fallthru
      _
    // Predicated region
    $region10: #{tpu_custom_call.1} parent=1 // pred_check
      _
    $region11: #{tpu_custom_call.1} parent=1 // pred_check_branch
      %36 = sbr.rel (0) target = $region13
    $region12: #{tpu_custom_call.1} parent=1 // pred_region
      _
    $region13: #{tpu_custom_call.1} parent=1 // pred_fallthru
      _
    // Predicated region
    $region14: #{tpu_custom_call.1} parent=1 // pred_check
      _
    $region15: #{tpu_custom_call.1} parent=1 // pred_check_branch
      %38 = sbr.rel (0) target = $region17
    $region16: #{tpu_custom_call.1} parent=1 // pred_region
      %39 = dma.done [#allocation3], 32768
    $region17: #{tpu_custom_call.1} parent=1 // pred_fallthru
      _
    // Predicated region
    $region18: #{tpu_custom_call.1} parent=1 // pred_check
      _
    $region19: #{tpu_custom_call.1} parent=1 // pred_check_branch
      %41 = sbr.rel (0) target = $region21
    $region20: #{tpu_custom_call.1} parent=1 // pred_region
      %42 = dma.done [#allocation6], 2048
    $region21: #{tpu_custom_call.1} parent=1 // pred_fallthru
      _
    %v43 = vld [vmem:[#allocation2] sm:$0xff]
    %v44 = vld [vmem:[#allocation2 + $0x8] sm:$0xff]
    %v45 = vld [vmem:[#allocation2 + $0x10] sm:$0xff]
    %v46 = vld [vmem:[#allocation2 + $0x18] sm:$0xff]
    %v47 = vld [vmem:[#allocation2 + $0x20] sm:$0xff]
    %v48 = vld [vmem:[#allocation2 + $0x28] sm:$0xff]
    %v49 = vld [vmem:[#allocation2 + $0x30] sm:$0xff]
    %v50 = vld [vmem:[#allocation2 + $0x38] sm:$0xff]
    %v51 = vld [vmem:[#allocation2 + $0x40] sm:$0xff]
    %v52 = vld [vmem:[#allocation2 + $0x48] sm:$0xff]
    %v53 = vld [vmem:[#allocation2 + $0x50] sm:$0xff]
    %v54 = vld [vmem:[#allocation2 + $0x58] sm:$0xff]
    %v55 = vld [vmem:[#allocation2 + $0x60] sm:$0xff]
    %v56 = vld [vmem:[#allocation2 + $0x68] sm:$0xff]
    %v57 = vld [vmem:[#allocation2 + $0x70] sm:$0xff]
    %v58 = vld [vmem:[#allocation2 + $0x78] sm:$0xff]
    %v59 = vld [vmem:[#allocation2 + $0x80] sm:$0xff]
    %v60 = vld [vmem:[#allocation2 + $0x88] sm:$0xff]
    %v61 = vld [vmem:[#allocation2 + $0x90] sm:$0xff]
    %v62 = vld [vmem:[#allocation2 + $0x98] sm:$0xff]
    %v63 = vld [vmem:[#allocation2 + $0xa0] sm:$0xff]
    %v64 = vld [vmem:[#allocation2 + $0xa8] sm:$0xff]
    %v65 = vld [vmem:[#allocation2 + $0xb0] sm:$0xff]
    %v66 = vld [vmem:[#allocation2 + $0xb8] sm:$0xff]
    %v67 = vld [vmem:[#allocation2 + $0xc0] sm:$0xff]
    %v68 = vld [vmem:[#allocation2 + $0xc8] sm:$0xff]
    %v69 = vld [vmem:[#allocation2 + $0xd0] sm:$0xff]
    %v70 = vld [vmem:[#allocation2 + $0xd8] sm:$0xff]
    %v71 = vld [vmem:[#allocation2 + $0xe0] sm:$0xff]
    %v72 = vld [vmem:[#allocation2 + $0xe8] sm:$0xff]
    %v73 = vld [vmem:[#allocation2 + $0xf0] sm:$0xff]
    %v74 = vld [vmem:[#allocation2 + $0xf8] sm:$0xff]
    %v75 = vld [vmem:[#allocation2 + $0x100] sm:$0xff]
    %v76 = vld [vmem:[#allocation2 + $0x108] sm:$0xff]
    %v77 = vld [vmem:[#allocation2 + $0x110] sm:$0xff]
    %v78 = vld [vmem:[#allocation2 + $0x118] sm:$0xff]
    %v79 = vld [vmem:[#allocation2 + $0x120] sm:$0xff]
    %v80 = vld [vmem:[#allocation2 + $0x128] sm:$0xff]
    %v81 = vld [vmem:[#allocation2 + $0x130] sm:$0xff]
    %v82 = vld [vmem:[#allocation2 + $0x138] sm:$0xff]
    %v83 = vld [vmem:[#allocation2 + $0x140] sm:$0xff]
    %v84 = vld [vmem:[#allocation2 + $0x148] sm:$0xff]
    %v85 = vld [vmem:[#allocation2 + $0x150] sm:$0xff]
    %v86 = vld [vmem:[#allocation2 + $0x158] sm:$0xff]
    %v87 = vld [vmem:[#allocation2 + $0x160] sm:$0xff]
    %v88 = vld [vmem:[#allocation2 + $0x168] sm:$0xff]
    %v89 = vld [vmem:[#allocation2 + $0x170] sm:$0xff]
    %v90 = vld [vmem:[#allocation2 + $0x178] sm:$0xff]
    %v91 = vld [vmem:[#allocation2 + $0x180] sm:$0xff]
    %v92 = vld [vmem:[#allocation2 + $0x188] sm:$0xff]
    %v93 = vld [vmem:[#allocation2 + $0x190] sm:$0xff]
    %v94 = vld [vmem:[#allocation2 + $0x198] sm:$0xff]
    %v95 = vld [vmem:[#allocation2 + $0x1a0] sm:$0xff]
    %v96 = vld [vmem:[#allocation2 + $0x1a8] sm:$0xff]
    %v97 = vld [vmem:[#allocation2 + $0x1b0] sm:$0xff]
    %v98 = vld [vmem:[#allocation2 + $0x1b8] sm:$0xff]
    %v99 = vld [vmem:[#allocation2 + $0x1c0] sm:$0xff]
    %v100 = vld [vmem:[#allocation2 + $0x1c8] sm:$0xff]
    %v101 = vld [vmem:[#allocation2 + $0x1d0] sm:$0xff]
    %v102 = vld [vmem:[#allocation2 + $0x1d8] sm:$0xff]
    %v103 = vld [vmem:[#allocation2 + $0x1e0] sm:$0xff]
    %v104 = vld [vmem:[#allocation2 + $0x1e8] sm:$0xff]
    %v105 = vld [vmem:[#allocation2 + $0x1f0] sm:$0xff]
    %v106 = vld [vmem:[#allocation2 + $0x1f8] sm:$0xff]
    %v107 = vld [vmem:[#allocation2 + $0x200] sm:$0xff]
    %v108 = vld [vmem:[#allocation2 + $0x208] sm:$0xff]
    %v109 = vld [vmem:[#allocation2 + $0x210] sm:$0xff]
    %v110 = vld [vmem:[#allocation2 + $0x218] sm:$0xff]
    %v111 = vld [vmem:[#allocation2 + $0x220] sm:$0xff]
    %v112 = vld [vmem:[#allocation2 + $0x228] sm:$0xff]
    %v113 = vld [vmem:[#allocation2 + $0x230] sm:$0xff]
    %v114 = vld [vmem:[#allocation2 + $0x238] sm:$0xff]
    %v115 = vld [vmem:[#allocation2 + $0x240] sm:$0xff]
    %v116 = vld [vmem:[#allocation2 + $0x248] sm:$0xff]
    %v117 = vld [vmem:[#allocation2 + $0x250] sm:$0xff]
    %v118 = vld [vmem:[#allocation2 + $0x258] sm:$0xff]
    %v119 = vld [vmem:[#allocation2 + $0x260] sm:$0xff]
    %v120 = vld [vmem:[#allocation2 + $0x268] sm:$0xff]
    %v121 = vld [vmem:[#allocation2 + $0x270] sm:$0xff]
    %v122 = vld [vmem:[#allocation2 + $0x278] sm:$0xff]
    %v123 = vld [vmem:[#allocation2 + $0x280] sm:$0xff]
    %v124 = vld [vmem:[#allocation2 + $0x288] sm:$0xff]
    %v125 = vld [vmem:[#allocation2 + $0x290] sm:$0xff]
    %v126 = vld [vmem:[#allocation2 + $0x298] sm:$0xff]
    %v127 = vld [vmem:[#allocation2 + $0x2a0] sm:$0xff]
    %v128 = vld [vmem:[#allocation2 + $0x2a8] sm:$0xff]
    %v129 = vld [vmem:[#allocation2 + $0x2b0] sm:$0xff]
    %v130 = vld [vmem:[#allocation2 + $0x2b8] sm:$0xff]
    %v131 = vld [vmem:[#allocation2 + $0x2c0] sm:$0xff]
    %v132 = vld [vmem:[#allocation2 + $0x2c8] sm:$0xff]
    %v133 = vld [vmem:[#allocation2 + $0x2d0] sm:$0xff]
    %v134 = vld [vmem:[#allocation2 + $0x2d8] sm:$0xff]
    %v135 = vld [vmem:[#allocation2 + $0x2e0] sm:$0xff]
    %v136 = vld [vmem:[#allocation2 + $0x2e8] sm:$0xff]
    %v137 = vld [vmem:[#allocation2 + $0x2f0] sm:$0xff]
    %v138 = vld [vmem:[#allocation2 + $0x2f8] sm:$0xff]
    %v139 = vld [vmem:[#allocation2 + $0x300] sm:$0xff]
    %v140 = vld [vmem:[#allocation2 + $0x308] sm:$0xff]
    %v141 = vld [vmem:[#allocation2 + $0x310] sm:$0xff]
    %v142 = vld [vmem:[#allocation2 + $0x318] sm:$0xff]
    %v143 = vld [vmem:[#allocation2 + $0x320] sm:$0xff]
    %v144 = vld [vmem:[#allocation2 + $0x328] sm:$0xff]
    %v145 = vld [vmem:[#allocation2 + $0x330] sm:$0xff]
    %v146 = vld [vmem:[#allocation2 + $0x338] sm:$0xff]
    %v147 = vld [vmem:[#allocation2 + $0x340] sm:$0xff]
    %v148 = vld [vmem:[#allocation2 + $0x348] sm:$0xff]
    %v149 = vld [vmem:[#allocation2 + $0x350] sm:$0xff]
    %v150 = vld [vmem:[#allocation2 + $0x358] sm:$0xff]
    %v151 = vld [vmem:[#allocation2 + $0x360] sm:$0xff]
    %v152 = vld [vmem:[#allocation2 + $0x368] sm:$0xff]
    %v153 = vld [vmem:[#allocation2 + $0x370] sm:$0xff]
    %v154 = vld [vmem:[#allocation2 + $0x378] sm:$0xff]
    %v155 = vld [vmem:[#allocation2 + $0x380] sm:$0xff]
    %v156 = vld [vmem:[#allocation2 + $0x388] sm:$0xff]
    %v157 = vld [vmem:[#allocation2 + $0x390] sm:$0xff]
    %v158 = vld [vmem:[#allocation2 + $0x398] sm:$0xff]
    %v159 = vld [vmem:[#allocation2 + $0x3a0] sm:$0xff]
    %v160 = vld [vmem:[#allocation2 + $0x3a8] sm:$0xff]
    %v161 = vld [vmem:[#allocation2 + $0x3b0] sm:$0xff]
    %v162 = vld [vmem:[#allocation2 + $0x3b8] sm:$0xff]
    %v163 = vld [vmem:[#allocation2 + $0x3c0] sm:$0xff]
    %v164 = vld [vmem:[#allocation2 + $0x3c8] sm:$0xff]
    %v165 = vld [vmem:[#allocation2 + $0x3d0] sm:$0xff]
    %v166 = vld [vmem:[#allocation2 + $0x3d8] sm:$0xff]
    %v167 = vld [vmem:[#allocation2 + $0x3e0] sm:$0xff]
    %v168 = vld [vmem:[#allocation2 + $0x3e8] sm:$0xff]
    %v169 = vld [vmem:[#allocation2 + $0x3f0] sm:$0xff]
    %v170 = vld [vmem:[#allocation2 + $0x3f8] sm:$0xff]
    %v171 = vld [vmem:[#allocation2 + $0x400] sm:$0xff]
    %v172 = vld [vmem:[#allocation2 + $0x408] sm:$0xff]
    %v173 = vld [vmem:[#allocation2 + $0x410] sm:$0xff]
    %v174 = vld [vmem:[#allocation2 + $0x418] sm:$0xff]
    %v175 = vld [vmem:[#allocation2 + $0x420] sm:$0xff]
    %v176 = vld [vmem:[#allocation2 + $0x428] sm:$0xff]
    %v177 = vld [vmem:[#allocation2 + $0x430] sm:$0xff]
    %v178 = vld [vmem:[#allocation2 + $0x438] sm:$0xff]
    %v179 = vld [vmem:[#allocation2 + $0x440] sm:$0xff]
    %v180 = vld [vmem:[#allocation2 + $0x448] sm:$0xff]
    %v181 = vld [vmem:[#allocation2 + $0x450] sm:$0xff]
    %v182 = vld [vmem:[#allocation2 + $0x458] sm:$0xff]
    %v183 = vld [vmem:[#allocation2 + $0x460] sm:$0xff]
    %v184 = vld [vmem:[#allocation2 + $0x468] sm:$0xff]
    %v185 = vld [vmem:[#allocation2 + $0x470] sm:$0xff]
    %v186 = vld [vmem:[#allocation2 + $0x478] sm:$0xff]
    %v187 = vld [vmem:[#allocation2 + $0x480] sm:$0xff]
    %v188 = vld [vmem:[#allocation2 + $0x488] sm:$0xff]
    %v189 = vld [vmem:[#allocation2 + $0x490] sm:$0xff]
    %v190 = vld [vmem:[#allocation2 + $0x498] sm:$0xff]
    %v191 = vld [vmem:[#allocation2 + $0x4a0] sm:$0xff]
    %v192 = vld [vmem:[#allocation2 + $0x4a8] sm:$0xff]
    %v193 = vld [vmem:[#allocation2 + $0x4b0] sm:$0xff]
    %v194 = vld [vmem:[#allocation2 + $0x4b8] sm:$0xff]
    %v195 = vld [vmem:[#allocation2 + $0x4c0] sm:$0xff]
    %v196 = vld [vmem:[#allocation2 + $0x4c8] sm:$0xff]
    %v197 = vld [vmem:[#allocation2 + $0x4d0] sm:$0xff]
    %v198 = vld [vmem:[#allocation2 + $0x4d8] sm:$0xff]
    %v199 = vld [vmem:[#allocation2 + $0x4e0] sm:$0xff]
    %v200 = vld [vmem:[#allocation2 + $0x4e8] sm:$0xff]
    %v201 = vld [vmem:[#allocation2 + $0x4f0] sm:$0xff]
    %v202 = vld [vmem:[#allocation2 + $0x4f8] sm:$0xff]
    %v203 = vld [vmem:[#allocation2 + $0x500] sm:$0xff]
    %v204 = vld [vmem:[#allocation2 + $0x508] sm:$0xff]
    %v205 = vld [vmem:[#allocation2 + $0x510] sm:$0xff]
    %v206 = vld [vmem:[#allocation2 + $0x518] sm:$0xff]
    %v207 = vld [vmem:[#allocation2 + $0x520] sm:$0xff]
    %v208 = vld [vmem:[#allocation2 + $0x528] sm:$0xff]
    %v209 = vld [vmem:[#allocation2 + $0x530] sm:$0xff]
    %v210 = vld [vmem:[#allocation2 + $0x538] sm:$0xff]
    %v211 = vld [vmem:[#allocation2 + $0x540] sm:$0xff]
    %v212 = vld [vmem:[#allocation2 + $0x548] sm:$0xff]
    %v213 = vld [vmem:[#allocation2 + $0x550] sm:$0xff]
    %v214 = vld [vmem:[#allocation2 + $0x558] sm:$0xff]
    %v215 = vld [vmem:[#allocation2 + $0x560] sm:$0xff]
    %v216 = vld [vmem:[#allocation2 + $0x568] sm:$0xff]
    %v217 = vld [vmem:[#allocation2 + $0x570] sm:$0xff]
    %v218 = vld [vmem:[#allocation2 + $0x578] sm:$0xff]
    %v219 = vld [vmem:[#allocation2 + $0x580] sm:$0xff]
    %v220 = vld [vmem:[#allocation2 + $0x588] sm:$0xff]
    %v221 = vld [vmem:[#allocation2 + $0x590] sm:$0xff]
    %v222 = vld [vmem:[#allocation2 + $0x598] sm:$0xff]
    %v223 = vld [vmem:[#allocation2 + $0x5a0] sm:$0xff]
    %v224 = vld [vmem:[#allocation2 + $0x5a8] sm:$0xff]
    %v225 = vld [vmem:[#allocation2 + $0x5b0] sm:$0xff]
    %v226 = vld [vmem:[#allocation2 + $0x5b8] sm:$0xff]
    %v227 = vld [vmem:[#allocation2 + $0x5c0] sm:$0xff]
    %v228 = vld [vmem:[#allocation2 + $0x5c8] sm:$0xff]
    %v229 = vld [vmem:[#allocation2 + $0x5d0] sm:$0xff]
    %v230 = vld [vmem:[#allocation2 + $0x5d8] sm:$0xff]
    %v231 = vld [vmem:[#allocation2 + $0x5e0] sm:$0xff]
    %v232 = vld [vmem:[#allocation2 + $0x5e8] sm:$0xff]
    %v233 = vld [vmem:[#allocation2 + $0x5f0] sm:$0xff]
    %v234 = vld [vmem:[#allocation2 + $0x5f8] sm:$0xff]
    %v235 = vld [vmem:[#allocation2 + $0x600] sm:$0xff]
    %v236 = vld [vmem:[#allocation2 + $0x608] sm:$0xff]
    %v237 = vld [vmem:[#allocation2 + $0x610] sm:$0xff]
    %v238 = vld [vmem:[#allocation2 + $0x618] sm:$0xff]
    %v239 = vld [vmem:[#allocation2 + $0x620] sm:$0xff]
    %v240 = vld [vmem:[#allocation2 + $0x628] sm:$0xff]
    %v241 = vld [vmem:[#allocation2 + $0x630] sm:$0xff]
    %v242 = vld [vmem:[#allocation2 + $0x638] sm:$0xff]
    %v243 = vld [vmem:[#allocation2 + $0x640] sm:$0xff]
    %v244 = vld [vmem:[#allocation2 + $0x648] sm:$0xff]
    %v245 = vld [vmem:[#allocation2 + $0x650] sm:$0xff]
    %v246 = vld [vmem:[#allocation2 + $0x658] sm:$0xff]
    %v247 = vld [vmem:[#allocation2 + $0x660] sm:$0xff]
    %v248 = vld [vmem:[#allocation2 + $0x668] sm:$0xff]
    %v249 = vld [vmem:[#allocation2 + $0x670] sm:$0xff]
    %v250 = vld [vmem:[#allocation2 + $0x678] sm:$0xff]
    %v251 = vld [vmem:[#allocation2 + $0x680] sm:$0xff]
    %v252 = vld [vmem:[#allocation2 + $0x688] sm:$0xff]
    %v253 = vld [vmem:[#allocation2 + $0x690] sm:$0xff]
    %v254 = vld [vmem:[#allocation2 + $0x698] sm:$0xff]
    %v255 = vld [vmem:[#allocation2 + $0x6a0] sm:$0xff]
    %v256 = vld [vmem:[#allocation2 + $0x6a8] sm:$0xff]
    %v257 = vld [vmem:[#allocation2 + $0x6b0] sm:$0xff]
    %v258 = vld [vmem:[#allocation2 + $0x6b8] sm:$0xff]
    %v259 = vld [vmem:[#allocation2 + $0x6c0] sm:$0xff]
    %v260 = vld [vmem:[#allocation2 + $0x6c8] sm:$0xff]
    %v261 = vld [vmem:[#allocation2 + $0x6d0] sm:$0xff]
    %v262 = vld [vmem:[#allocation2 + $0x6d8] sm:$0xff]
    %v263 = vld [vmem:[#allocation2 + $0x6e0] sm:$0xff]
    %v264 = vld [vmem:[#allocation2 + $0x6e8] sm:$0xff]
    %v265 = vld [vmem:[#allocation2 + $0x6f0] sm:$0xff]
    %v266 = vld [vmem:[#allocation2 + $0x6f8] sm:$0xff]
    %v267 = vld [vmem:[#allocation2 + $0x700] sm:$0xff]
    %v268 = vld [vmem:[#allocation2 + $0x708] sm:$0xff]
    %v269 = vld [vmem:[#allocation2 + $0x710] sm:$0xff]
    %v270 = vld [vmem:[#allocation2 + $0x718] sm:$0xff]
    %v271 = vld [vmem:[#allocation2 + $0x720] sm:$0xff]
    %v272 = vld [vmem:[#allocation2 + $0x728] sm:$0xff]
    %v273 = vld [vmem:[#allocation2 + $0x730] sm:$0xff]
    %v274 = vld [vmem:[#allocation2 + $0x738] sm:$0xff]
    %v275 = vld [vmem:[#allocation2 + $0x740] sm:$0xff]
    %v276 = vld [vmem:[#allocation2 + $0x748] sm:$0xff]
    %v277 = vld [vmem:[#allocation2 + $0x750] sm:$0xff]
    %v278 = vld [vmem:[#allocation2 + $0x758] sm:$0xff]
    %v279 = vld [vmem:[#allocation2 + $0x760] sm:$0xff]
    %v280 = vld [vmem:[#allocation2 + $0x768] sm:$0xff]
    %v281 = vld [vmem:[#allocation2 + $0x770] sm:$0xff]
    %v282 = vld [vmem:[#allocation2 + $0x778] sm:$0xff]
    %v283 = vld [vmem:[#allocation2 + $0x780] sm:$0xff]
    %v284 = vld [vmem:[#allocation2 + $0x788] sm:$0xff]
    %v285 = vld [vmem:[#allocation2 + $0x790] sm:$0xff]
    %v286 = vld [vmem:[#allocation2 + $0x798] sm:$0xff]
    %v287 = vld [vmem:[#allocation2 + $0x7a0] sm:$0xff]
    %v288 = vld [vmem:[#allocation2 + $0x7a8] sm:$0xff]
    %v289 = vld [vmem:[#allocation2 + $0x7b0] sm:$0xff]
    %v290 = vld [vmem:[#allocation2 + $0x7b8] sm:$0xff]
    %v291 = vld [vmem:[#allocation2 + $0x7c0] sm:$0xff]
    %v292 = vld [vmem:[#allocation2 + $0x7c8] sm:$0xff]
    %v293 = vld [vmem:[#allocation2 + $0x7d0] sm:$0xff]
    %v294 = vld [vmem:[#allocation2 + $0x7d8] sm:$0xff]
    %v295 = vld [vmem:[#allocation2 + $0x7e0] sm:$0xff]
    %v296 = vld [vmem:[#allocation2 + $0x7e8] sm:$0xff]
    %v297 = vld [vmem:[#allocation2 + $0x7f0] sm:$0xff]
    %v298 = vld [vmem:[#allocation2 + $0x7f8] sm:$0xff]
    %v299 = vadd.f32 %v43, %v44
    %v300 = vadd.f32 %v299, %v45
    %v301 = vadd.f32 %v300, %v46
    %v302 = vadd.f32 %v301, %v47
    %v303 = vadd.f32 %v302, %v48
    %v304 = vadd.f32 %v303, %v49
    %v305 = vadd.f32 %v304, %v50
    %v306 = vadd.f32 %v305, %v51
    %v307 = vadd.f32 %v306, %v52
    %v308 = vadd.f32 %v307, %v53
    %v309 = vadd.f32 %v308, %v54
    %v310 = vadd.f32 %v309, %v55
    %v311 = vadd.f32 %v310, %v56
    %v312 = vadd.f32 %v311, %v57
    %v313 = vadd.f32 %v312, %v58
    %v314 = vadd.f32 %v313, %v59
    %v315 = vadd.f32 %v314, %v60
    %v316 = vadd.f32 %v315, %v61
    %v317 = vadd.f32 %v316, %v62
    %v318 = vadd.f32 %v317, %v63
    %v319 = vadd.f32 %v318, %v64
    %v320 = vadd.f32 %v319, %v65
    %v321 = vadd.f32 %v320, %v66
    %v322 = vadd.f32 %v321, %v67
    %v323 = vadd.f32 %v322, %v68
    %v324 = vadd.f32 %v323, %v69
    %v325 = vadd.f32 %v324, %v70
    %v326 = vadd.f32 %v325, %v71
    %v327 = vadd.f32 %v326, %v72
    %v328 = vadd.f32 %v327, %v73
    %v329 = vadd.f32 %v328, %v74
    %v330 = vrot.slane %v329, 4
    %v331 = vadd.f32 %v329, %v330
    %v332 = vrot.slane %v331, 2
    %v333 = vadd.f32 %v331, %v332
    %v334 = vrot.slane %v333, 1
    %v335 = vadd.f32 %v333, %v334
    %v336 = vadd.f32 %v75, %v76
    %v337 = vadd.f32 %v336, %v77
    %v338 = vadd.f32 %v337, %v78
    %v339 = vadd.f32 %v338, %v79
    %v340 = vadd.f32 %v339, %v80
    %v341 = vadd.f32 %v340, %v81
    %v342 = vadd.f32 %v341, %v82
    %v343 = vadd.f32 %v342, %v83
    %v344 = vadd.f32 %v343, %v84
    %v345 = vadd.f32 %v344, %v85
    %v346 = vadd.f32 %v345, %v86
    %v347 = vadd.f32 %v346, %v87
    %v348 = vadd.f32 %v347, %v88
    %v349 = vadd.f32 %v348, %v89
    %v350 = vadd.f32 %v349, %v90
    %v351 = vadd.f32 %v350, %v91
    %v352 = vadd.f32 %v351, %v92
    %v353 = vadd.f32 %v352, %v93
    %v354 = vadd.f32 %v353, %v94
    %v355 = vadd.f32 %v354, %v95
    %v356 = vadd.f32 %v355, %v96
    %v357 = vadd.f32 %v356, %v97
    %v358 = vadd.f32 %v357, %v98
    %v359 = vadd.f32 %v358, %v99
    %v360 = vadd.f32 %v359, %v100
    %v361 = vadd.f32 %v360, %v101
    %v362 = vadd.f32 %v361, %v102
    %v363 = vadd.f32 %v362, %v103
    %v364 = vadd.f32 %v363, %v104
    %v365 = vadd.f32 %v364, %v105
    %v366 = vadd.f32 %v365, %v106
    %v367 = vrot.slane %v366, 4
    %v368 = vadd.f32 %v366, %v367
    %v369 = vrot.slane %v368, 2
    %v370 = vadd.f32 %v368, %v369
    %v371 = vrot.slane %v370, 1
    %v372 = vadd.f32 %v370, %v371
    %v373 = vadd.f32 %v107, %v108
    %v374 = vadd.f32 %v373, %v109
    %v375 = vadd.f32 %v374, %v110
    %v376 = vadd.f32 %v375, %v111
    %v377 = vadd.f32 %v376, %v112
    %v378 = vadd.f32 %v377, %v113
    %v379 = vadd.f32 %v378, %v114
    %v380 = vadd.f32 %v379, %v115
    %v381 = vadd.f32 %v380, %v116
    %v382 = vadd.f32 %v381, %v117
    %v383 = vadd.f32 %v382, %v118
    %v384 = vadd.f32 %v383, %v119
    %v385 = vadd.f32 %v384, %v120
    %v386 = vadd.f32 %v385, %v121
    %v387 = vadd.f32 %v386, %v122
    %v388 = vadd.f32 %v387, %v123
    %v389 = vadd.f32 %v388, %v124
    %v390 = vadd.f32 %v389, %v125
    %v391 = vadd.f32 %v390, %v126
    %v392 = vadd.f32 %v391, %v127
    %v393 = vadd.f32 %v392, %v128
    %v394 = vadd.f32 %v393, %v129
    %v395 = vadd.f32 %v394, %v130
    %v396 = vadd.f32 %v395, %v131
    %v397 = vadd.f32 %v396, %v132
    %v398 = vadd.f32 %v397, %v133
    %v399 = vadd.f32 %v398, %v134
    %v400 = vadd.f32 %v399, %v135
    %v401 = vadd.f32 %v400, %v136
    %v402 = vadd.f32 %v401, %v137
    %v403 = vadd.f32 %v402, %v138
    %v404 = vrot.slane %v403, 4
    %v405 = vadd.f32 %v403, %v404
    %v406 = vrot.slane %v405, 2
    %v407 = vadd.f32 %v405, %v406
    %v408 = vrot.slane %v407, 1
    %v409 = vadd.f32 %v407, %v408
    %v410 = vadd.f32 %v139, %v140
    %v411 = vadd.f32 %v410, %v141
    %v412 = vadd.f32 %v411, %v142
    %v413 = vadd.f32 %v412, %v143
    %v414 = vadd.f32 %v413, %v144
    %v415 = vadd.f32 %v414, %v145
    %v416 = vadd.f32 %v415, %v146
    %v417 = vadd.f32 %v416, %v147
    %v418 = vadd.f32 %v417, %v148
    %v419 = vadd.f32 %v418, %v149
    %v420 = vadd.f32 %v419, %v150
    %v421 = vadd.f32 %v420, %v151
    %v422 = vadd.f32 %v421, %v152
    %v423 = vadd.f32 %v422, %v153
    %v424 = vadd.f32 %v423, %v154
    %v425 = vadd.f32 %v424, %v155
    %v426 = vadd.f32 %v425, %v156
    %v427 = vadd.f32 %v426, %v157
    %v428 = vadd.f32 %v427, %v158
    %v429 = vadd.f32 %v428, %v159
    %v430 = vadd.f32 %v429, %v160
    %v431 = vadd.f32 %v430, %v161
    %v432 = vadd.f32 %v431, %v162
    %v433 = vadd.f32 %v432, %v163
    %v434 = vadd.f32 %v433, %v164
    %v435 = vadd.f32 %v434, %v165
    %v436 = vadd.f32 %v435, %v166
    %v437 = vadd.f32 %v436, %v167
    %v438 = vadd.f32 %v437, %v168
    %v439 = vadd.f32 %v438, %v169
    %v440 = vadd.f32 %v439, %v170
    %v441 = vrot.slane %v440, 4
    %v442 = vadd.f32 %v440, %v441
    %v443 = vrot.slane %v442, 2
    %v444 = vadd.f32 %v442, %v443
    %v445 = vrot.slane %v444, 1
    %v446 = vadd.f32 %v444, %v445
    %v447 = vadd.f32 %v171, %v172
    %v448 = vadd.f32 %v447, %v173
    %v449 = vadd.f32 %v448, %v174
    %v450 = vadd.f32 %v449, %v175
    %v451 = vadd.f32 %v450, %v176
    %v452 = vadd.f32 %v451, %v177
    %v453 = vadd.f32 %v452, %v178
    %v454 = vadd.f32 %v453, %v179
    %v455 = vadd.f32 %v454, %v180
    %v456 = vadd.f32 %v455, %v181
    %v457 = vadd.f32 %v456, %v182
    %v458 = vadd.f32 %v457, %v183
    %v459 = vadd.f32 %v458, %v184
    %v460 = vadd.f32 %v459, %v185
    %v461 = vadd.f32 %v460, %v186
    %v462 = vadd.f32 %v461, %v187
    %v463 = vadd.f32 %v462, %v188
    %v464 = vadd.f32 %v463, %v189
    %v465 = vadd.f32 %v464, %v190
    %v466 = vadd.f32 %v465, %v191
    %v467 = vadd.f32 %v466, %v192
    %v468 = vadd.f32 %v467, %v193
    %v469 = vadd.f32 %v468, %v194
    %v470 = vadd.f32 %v469, %v195
    %v471 = vadd.f32 %v470, %v196
    %v472 = vadd.f32 %v471, %v197
    %v473 = vadd.f32 %v472, %v198
    %v474 = vadd.f32 %v473, %v199
    %v475 = vadd.f32 %v474, %v200
    %v476 = vadd.f32 %v475, %v201
    %v477 = vadd.f32 %v476, %v202
    %v478 = vrot.slane %v477, 4
    %v479 = vadd.f32 %v477, %v478
    %v480 = vrot.slane %v479, 2
    %v481 = vadd.f32 %v479, %v480
    %v482 = vrot.slane %v481, 1
    %v483 = vadd.f32 %v481, %v482
    %v484 = vadd.f32 %v203, %v204
    %v485 = vadd.f32 %v484, %v205
    %v486 = vadd.f32 %v485, %v206
    %v487 = vadd.f32 %v486, %v207
    %v488 = vadd.f32 %v487, %v208
    %v489 = vadd.f32 %v488, %v209
    %v490 = vadd.f32 %v489, %v210
    %v491 = vadd.f32 %v490, %v211
    %v492 = vadd.f32 %v491, %v212
    %v493 = vadd.f32 %v492, %v213
    %v494 = vadd.f32 %v493, %v214
    %v495 = vadd.f32 %v494, %v215
    %v496 = vadd.f32 %v495, %v216
    %v497 = vadd.f32 %v496, %v217
    %v498 = vadd.f32 %v497, %v218
    %v499 = vadd.f32 %v498, %v219
    %v500 = vadd.f32 %v499, %v220
    %v501 = vadd.f32 %v500, %v221
    %v502 = vadd.f32 %v501, %v222
    %v503 = vadd.f32 %v502, %v223
    %v504 = vadd.f32 %v503, %v224
    %v505 = vadd.f32 %v504, %v225
    %v506 = vadd.f32 %v505, %v226
    %v507 = vadd.f32 %v506, %v227
    %v508 = vadd.f32 %v507, %v228
    %v509 = vadd.f32 %v508, %v229
    %v510 = vadd.f32 %v509, %v230
    %v511 = vadd.f32 %v510, %v231
    %v512 = vadd.f32 %v511, %v232
    %v513 = vadd.f32 %v512, %v233
    %v514 = vadd.f32 %v513, %v234
    %v515 = vrot.slane %v514, 4
    %v516 = vadd.f32 %v514, %v515
    %v517 = vrot.slane %v516, 2
    %v518 = vadd.f32 %v516, %v517
    %v519 = vrot.slane %v518, 1
    %v520 = vadd.f32 %v518, %v519
    %v521 = vadd.f32 %v235, %v236
    %v522 = vadd.f32 %v521, %v237
    %v523 = vadd.f32 %v522, %v238
    %v524 = vadd.f32 %v523, %v239
    %v525 = vadd.f32 %v524, %v240
    %v526 = vadd.f32 %v525, %v241
    %v527 = vadd.f32 %v526, %v242
    %v528 = vadd.f32 %v527, %v243
    %v529 = vadd.f32 %v528, %v244
    %v530 = vadd.f32 %v529, %v245
    %v531 = vadd.f32 %v530, %v246
    %v532 = vadd.f32 %v531, %v247
    %v533 = vadd.f32 %v532, %v248
    %v534 = vadd.f32 %v533, %v249
    %v535 = vadd.f32 %v534, %v250
    %v536 = vadd.f32 %v535, %v251
    %v537 = vadd.f32 %v536, %v252
    %v538 = vadd.f32 %v537, %v253
    %v539 = vadd.f32 %v538, %v254
    %v540 = vadd.f32 %v539, %v255
    %v541 = vadd.f32 %v540, %v256
    %v542 = vadd.f32 %v541, %v257
    %v543 = vadd.f32 %v542, %v258
    %v544 = vadd.f32 %v543, %v259
    %v545 = vadd.f32 %v544, %v260
    %v546 = vadd.f32 %v545, %v261
    %v547 = vadd.f32 %v546, %v262
    %v548 = vadd.f32 %v547, %v263
    %v549 = vadd.f32 %v548, %v264
    %v550 = vadd.f32 %v549, %v265
    %v551 = vadd.f32 %v550, %v266
    %v552 = vrot.slane %v551, 4
    %v553 = vadd.f32 %v551, %v552
    %v554 = vrot.slane %v553, 2
    %v555 = vadd.f32 %v553, %v554
    %v556 = vrot.slane %v555, 1
    %v557 = vadd.f32 %v555, %v556
    %v558 = vadd.f32 %v267, %v268
    %v559 = vadd.f32 %v558, %v269
    %v560 = vadd.f32 %v559, %v270
    %v561 = vadd.f32 %v560, %v271
    %v562 = vadd.f32 %v561, %v272
    %v563 = vadd.f32 %v562, %v273
    %v564 = vadd.f32 %v563, %v274
    %v565 = vadd.f32 %v564, %v275
    %v566 = vadd.f32 %v565, %v276
    %v567 = vadd.f32 %v566, %v277
    %v568 = vadd.f32 %v567, %v278
    %v569 = vadd.f32 %v568, %v279
    %v570 = vadd.f32 %v569, %v280
    %v571 = vadd.f32 %v570, %v281
    %v572 = vadd.f32 %v571, %v282
    %v573 = vadd.f32 %v572, %v283
    %v574 = vadd.f32 %v573, %v284
    %v575 = vadd.f32 %v574, %v285
    %v576 = vadd.f32 %v575, %v286
    %v577 = vadd.f32 %v576, %v287
    %v578 = vadd.f32 %v577, %v288
    %v579 = vadd.f32 %v578, %v289
    %v580 = vadd.f32 %v579, %v290
    %v581 = vadd.f32 %v580, %v291
    %v582 = vadd.f32 %v581, %v292
    %v583 = vadd.f32 %v582, %v293
    %v584 = vadd.f32 %v583, %v294
    %v585 = vadd.f32 %v584, %v295
    %v586 = vadd.f32 %v585, %v296
    %v587 = vadd.f32 %v586, %v297
    %v588 = vadd.f32 %v587, %v298
    %v589 = vrot.slane %v588, 4
    %v590 = vadd.f32 %v588, %v589
    %v591 = vrot.slane %v590, 2
    %v592 = vadd.f32 %v590, %v591
    %v593 = vrot.slane %v592, 1
    %v594 = vadd.f32 %v592, %v593
    %v595 = vmul.f32 %v335, 0.00390625
    %v596 = vmul.f32 %v372, 0.00390625
    %v597 = vmul.f32 %v409, 0.00390625
    %v598 = vmul.f32 %v446, 0.00390625
    %v599 = vmul.f32 %v483, 0.00390625
    %v600 = vmul.f32 %v520, 0.00390625
    %v601 = vmul.f32 %v557, 0.00390625
    %v602 = vmul.f32 %v594, 0.00390625
    %v603 = vld [vmem:[#allocation5] sm:$0xff]
    %v604 = vld [vmem:[#allocation5 + $0x8] sm:$0xff]
    %v605 = vld [vmem:[#allocation5 + $0x10] sm:$0xff]
    %v606 = vld [vmem:[#allocation5 + $0x18] sm:$0xff]
    %v607 = vld [vmem:[#allocation5 + $0x20] sm:$0xff]
    %v608 = vld [vmem:[#allocation5 + $0x28] sm:$0xff]
    %v609 = vld [vmem:[#allocation5 + $0x30] sm:$0xff]
    %v610 = vld [vmem:[#allocation5 + $0x38] sm:$0xff]
    %v611 = vld [vmem:[#allocation5 + $0x40] sm:$0xff]
    %v612 = vld [vmem:[#allocation5 + $0x48] sm:$0xff]
    %v613 = vld [vmem:[#allocation5 + $0x50] sm:$0xff]
    %v614 = vld [vmem:[#allocation5 + $0x58] sm:$0xff]
    %v615 = vld [vmem:[#allocation5 + $0x60] sm:$0xff]
    %v616 = vld [vmem:[#allocation5 + $0x68] sm:$0xff]
    %v617 = vld [vmem:[#allocation5 + $0x70] sm:$0xff]
    %v618 = vld [vmem:[#allocation5 + $0x78] sm:$0xff]
    %v619 = vld [vmem:[%s2] sm:$0x1]
    %v621 = vlaneseq
    %v622 = vshrl.u32 %v621, 7
    %v623 = vsub.s32 0, %v622
    %v624 = vrot.slane %v619, %v623
    %vm634 = vcmask 1041409
    %v635 = vsel %vm634, %v596, %v595
    %vm636 = vcmask 1042434
    %v637 = vsel %vm636, %v597, %v635
    %vm638 = vcmask 1043459
    %v639 = vsel %vm638, %v598, %v637
    %vm640 = vcmask 1044484
    %v641 = vsel %vm640, %v599, %v639
    %vm642 = vcmask 1045509
    %v643 = vsel %vm642, %v600, %v641
    %vm644 = vcmask 1046534
    %v645 = vsel %vm644, %v601, %v643
    %vm646 = vcmask 1047559
    %v647 = vsel %vm646, %v602, %v645
    %649 = vmatprep.subr.mxu0 0.0
    %650 = vmatpush1.msra.mxu0 %v603
    %651 = vmatprep.subr.mxu0 0.0
    %652 = vmatpush1.msra.mxu0 %v604
    %653 = vmatprep.subr.mxu0 0.0
    %654 = vmatpush1.msra.mxu0 %v605
    %655 = vmatprep.subr.mxu0 0.0
    %656 = vmatpush1.msra.mxu0 %v606
    %657 = vmatprep.subr.mxu0 0.0
    %658 = vmatpush1.msra.mxu0 %v607
    %659 = vmatprep.subr.mxu0 0.0
    %660 = vmatpush1.msra.mxu0 %v608
    %661 = vmatprep.subr.mxu0 0.0
    %662 = vmatpush1.msra.mxu0 %v609
    %663 = vmatprep.subr.mxu0 0.0
    %664 = vmatpush1.msra.mxu0 %v610
    %665 = vmatprep.subr.mxu0 0.0
    %666 = vmatpush1.msra.mxu0 %v611
    %667 = vmatprep.subr.mxu0 0.0
    %668 = vmatpush1.msra.mxu0 %v612
    %669 = vmatprep.subr.mxu0 0.0
    %670 = vmatpush1.msra.mxu0 %v613
    %671 = vmatprep.subr.mxu0 0.0
    %672 = vmatpush1.msra.mxu0 %v614
    %673 = vmatprep.subr.mxu0 0.0
    %674 = vmatpush1.msra.mxu0 %v615
    %675 = vmatprep.subr.mxu0 0.0
    %676 = vmatpush1.msra.mxu0 %v616
    %677 = vmatprep.subr.mxu0 0.0
    %678 = vmatpush1.msra.mxu0 %v617
    %679 = vmatprep.subr.mxu0 0.0
    %680 = vmatpush1.msra.mxu0 %v618
    %681 = vmatprep.subr.mxu0 0.0
    %682 = vmatpush1.msra.mxu0 0.0
    %683 = vmatprep.subr.mxu0 0.0
    %684 = vmatpush1.msra.mxu0 0.0
    %685 = vmatprep.subr.mxu0 0.0
    %686 = vmatpush1.msra.mxu0 0.0
    %687 = vmatprep.subr.mxu0 0.0
    %688 = vmatpush1.msra.mxu0 0.0
    %689 = vmatprep.subr.mxu0 0.0
    %690 = vmatpush1.msra.mxu0 0.0
    %691 = vmatprep.subr.mxu0 0.0
    %692 = vmatpush1.msra.mxu0 0.0
    %693 = vmatprep.subr.mxu0 0.0
    %694 = vmatpush1.msra.mxu0 0.0
    %695 = vmatprep.subr.mxu0 0.0
    %696 = vmatpush1.msra.mxu0 0.0
    %697 = vmatprep.subr.mxu0 0.0
    %698 = vmatpush1.msra.mxu0 0.0
    %699 = vmatprep.subr.mxu0 0.0
    %700 = vmatpush1.msra.mxu0 0.0
    %701 = vmatprep.subr.mxu0 0.0
    %702 = vmatpush1.msra.mxu0 0.0
    %703 = vmatprep.subr.mxu0 0.0
    %704 = vmatpush1.msra.mxu0 0.0
    %705 = vmatprep.subr.mxu0 0.0
    %706 = vmatpush1.msra.mxu0 0.0
    %707 = vmatprep.subr.mxu0 0.0
    %708 = vmatpush1.msra.mxu0 0.0
    %709 = vmatprep.subr.mxu0 0.0
    %710 = vmatpush1.msra.mxu0 0.0
    %711 = vmatprep.subr.mxu0 0.0
    %712 = vmatpush1.msra.mxu0 0.0
    %713 = vmatprep.mubr.f32.mxu0 0.0
    %714 = vmatmul.mubr.f32.gmra.mrb[0].mxu0 %v647
    %v715 = vpop.f32.mrb[0].mxu0
    %v716 = vadd.f32 %v624, %v715
    %v717 = vpop.f32.mrb[0].mxu0
    %718 = vdwg.mxu0
    %719 = vst [vmem:[#allocation7] sm:$0xff] %v716
    // Predicated region
    $region22: #{tpu_custom_call.1} parent=1 // pred_check
      _
    $region23: #{tpu_custom_call.1} parent=1 // pred_check_branch
      %721 = sbr.rel (0) target = $region25
    $region24: #{tpu_custom_call.1} parent=1 // pred_region
      %s723 = ssub.s32 128, 128
      %724 = vsyncadd [#allocation4], %s723
      %s726 = sshll.u32 [#allocation7], 4
      %s727 = int_to_ptr.vmem [resolvable:$true] %s726
      %729 = dma.vmem_to_hbm [thread:$0]  %s727, 128, %s3, [#allocation4]
    $region25: #{tpu_custom_call.1} parent=1 // pred_fallthru
      _
    // Predicated region
    $region26: #{tpu_custom_call.1} parent=1 // pred_check
      _
    $region27: #{tpu_custom_call.1} parent=1 // pred_check_branch
      %731 = sbr.rel (0) target = $region29
    $region28: #{tpu_custom_call.1} parent=1 // pred_region
      %732 = dma.done [#allocation4], 128
    $region29: #{tpu_custom_call.1} parent=1 // pred_fallthru
      _
    %733 = vsyncpa [#allocation3], 1
    %734 = vsyncpa [#allocation6], 1
    %735 = vsyncpa [#allocation4], 1

</llo_original>
